<compile_context>
chip_gen: v7x
topology: tpu7x:2x2x1
jax: 0.10.0
libtpu: 0.0.40
codegen_flags: <defaults>
</compile_context>

<pallas_src>
import functools

import jax
import jax.numpy as jnp
from jax.experimental import pallas as pl
from jax.experimental.pallas import tpu as pltpu


_MAX_UNROLL_CHUNKS = 64          # cap on statically-unrolled 128-lane adds


# --------------------------------------------------------------------------
# helpers
# --------------------------------------------------------------------------
def _pick_tile(dim, unit, max_tile):
    """Largest multiple of `unit` dividing `dim`, capped at `max_tile`.
    Falls back to the full dim (always a legal block size) if none exists."""
    best = None
    t = unit
    while t <= dim and t <= max_tile:
        if dim % t == 0:
            best = t
        t += unit
    return best if best is not None else dim


def _largest_divisor(n, cap):
    """Largest divisor of n that is <= cap (0 if cap < 1)."""
    best = 0
    for t in range(1, n + 1):
        if t > cap:
            break
        if n % t == 0:
            best = t
    return best


def _vmem_budget():
    """(vmem_limit_bytes, working_budget_bytes). Conservative v7x defaults."""
    phys = 64 * 1024 * 1024                       # v7x physical VMEM per TC
    try:
        phys = int(pltpu.get_tpu_info().vmem_capacity_bytes)
    except Exception:
        pass
    vmem_limit = min(phys // 2, 64 * 1024 * 1024)  # 32 MiB v7x, 64 MiB v5e/v6e
    work_budget = (vmem_limit * 2) // 3
    return vmem_limit, work_budget


def _chunked_f32_sum(x):
    """Sum over the last axis of a 3-D tile (f32 result).

    When the last dim is a multiple of 128, the bulk of the reduction is
    unrolled 128-lane VALU adds; only one cross-lane (XLU) reduce remains.
    """
    L = x.shape[-1]
    if L % 128 == 0 and 128 < L <= 128 * _MAX_UNROLL_CHUNKS:
        part = x[:, :, 0:128].astype(jnp.float32)
        for off in range(128, L, 128):
            part = part + x[:, :, off:off + 128].astype(jnp.float32)
        return jnp.sum(part, axis=-1)
    return jnp.sum(x.astype(jnp.float32), axis=-1)


# --------------------------------------------------------------------------
# kernels
# --------------------------------------------------------------------------
def _fused_se_kernel(x_ref, w1_ref, b1_ref, w2_ref, b2_ref, o_ref, *, inv_l):
    """Single pass: pooled mean -> MLP -> rescale, one batch slab per step."""
    x = x_ref[...]                                            # (tb, C, L)
    pooled = _chunked_f32_sum(x) * inv_l                      # (tb, C) f32
    h = jnp.dot(pooled, w1_ref[...], preferred_element_type=jnp.float32)
    h = jnp.maximum(h + b1_ref[...], 0.0)                     # ReLU
    z = jnp.dot(h, w2_ref[...], preferred_element_type=jnp.float32) + b2_ref[...]
    s = jnp.clip(z * (1.0 / 6.0) + 0.5, 0.0, 1.0)             # Hardsigmoid
    o_ref[...] = x * s[:, :, None].astype(x.dtype)


def _pool_sum_kernel(x_ref, o_ref, acc_ref, *, lanes_mode):
    """Phase 1 (fallback): accumulate the L-sum in f32.

    lanes_mode: accumulator is (tb, C, 128); per-step work is unrolled VALU
    adds, the single XLU lane-reduce happens once in the finalize branch.
    """
    l = pl.program_id(1)

    @pl.when(l == 0)
    def _init():
        acc_ref[...] = jnp.zeros_like(acc_ref)

    x = x_ref[...]                                            # (tb, C, tl)
    if lanes_mode:
        tl = x.shape[-1]
        part = acc_ref[...]                                   # (tb, C, 128)
        for off in range(0, tl, 128):
            part = part + x[:, :, off:off + 128].astype(jnp.float32)
        acc_ref[...] = part
    else:
        acc_ref[...] += jnp.sum(x.astype(jnp.float32), axis=-1)

    @pl.when(l == pl.num_programs(1) - 1)
    def _finalize():
        if lanes_mode:
            o_ref[0] = jnp.sum(acc_ref[...], axis=-1)         # one XLU reduce
        else:
            o_ref[0] = acc_ref[...]


def _rescale_kernel(s_ref, x_ref, o_ref):
    """Phase 2 (fallback): one VPU multiply per tile; scale broadcasts on lanes."""
    x = x_ref[...]
    o_ref[...] = x * s_ref[...].astype(x.dtype)


# --------------------------------------------------------------------------
# wrapper
# --------------------------------------------------------------------------
def se_block(x, w1, b1, w2, b2, *, fused=None):
    """x: (B, C, L). w1: (C, Cr), b1: (Cr,), w2: (Cr, C), b2: (C,).
    `fused`: None = auto (by VMEM budget), True/False = force a path."""
    B, C, L = x.shape
    Cr = w1.shape[1]
    itemsize = x.dtype.itemsize
    vmem_limit, work_budget = _vmem_budget()

    # ---------------- fused single-pass path --------------------------------
    per_b = C * L * itemsize                       # one batch-row slab of x
    tb_f = 0
    if fused is not False:
        cap = work_budget // max(1, 6 * per_b)     # 2 in + 2 out bufs + temps
        if cap >= 1:
            if B >= 2:
                cap = min(cap, max(1, B // 2))     # >=2 blocks for megacore
            tb_f = _largest_divisor(B, cap)

    if tb_f >= 1:
        b1_2d = b1.reshape(1, Cr)
        b2_2d = b2.reshape(1, C)
        return pl.pallas_call(
            functools.partial(_fused_se_kernel, inv_l=1.0 / L),
            out_shape=jax.ShapeDtypeStruct((B, C, L), x.dtype),
            grid=(B // tb_f,),
            in_specs=[
                pl.BlockSpec((tb_f, C, L), lambda b: (b, 0, 0)),
                pl.BlockSpec((C, Cr), lambda b: (0, 0)),
                pl.BlockSpec((1, Cr), lambda b: (0, 0)),
                pl.BlockSpec((Cr, C), lambda b: (0, 0)),
                pl.BlockSpec((1, C), lambda b: (0, 0)),
            ],
            out_specs=pl.BlockSpec((tb_f, C, L), lambda b: (b, 0, 0)),
            compiler_params=pltpu.CompilerParams(
                dimension_semantics=("parallel",),
                vmem_limit_bytes=vmem_limit),
            cost_estimate=pl.CostEstimate(
                flops=2 * B * C * L + 2 * B * C * Cr + 2 * B * Cr * C,
                transcendentals=0,
                bytes_accessed=2 * B * C * L * itemsize),
        )(x, w1, b1_2d, w2, b2_2d)

    # ---------------- two-phase fallback -------------------------------------
    block_cap = max(128 * 128 * itemsize,
                    min(4 * 1024 * 1024, work_budget // 4))

    # Phase 1: pooled sum over L (f32 accumulation).
    lanes_mode = (L % 128 == 0)
    if lanes_mode:
        tl_cap = min(block_cap // max(1, C * itemsize), 128 * _MAX_UNROLL_CHUNKS)
        tl_pool = _pick_tile(L, 128, max(128, tl_cap))
    else:
        # TODO(synk): for L not a multiple of 128, stores/loads fall back to
        # masked sub-128-lane tiles; a padded view would need a masked sum.
        tl_pool = L
    row_cap = max(1, block_cap // max(1, C * tl_pool * itemsize))
    if B >= 2:
        row_cap = min(row_cap, max(1, B // 2))     # >=2 B-blocks for megacore
    tb = _largest_divisor(B, row_cap)
    nb = B // tb
    acc_shape = (tb, C, 128) if lanes_mode else (tb, C)

    sums = pl.pallas_call(
        functools.partial(_pool_sum_kernel, lanes_mode=lanes_mode),
        out_shape=jax.ShapeDtypeStruct((nb, tb, C), jnp.float32),
        grid=(nb, L // tl_pool),
        in_specs=[pl.BlockSpec((tb, C, tl_pool), lambda b, l: (b, 0, l))],
        out_specs=pl.BlockSpec((1, tb, C), lambda b, l: (b, 0, 0)),
        scratch_shapes=[pltpu.VMEM(acc_shape, jnp.float32)],
        compiler_params=pltpu.CompilerParams(
            dimension_semantics=("parallel", "arbitrary"),
            vmem_limit_bytes=vmem_limit),
        cost_estimate=pl.CostEstimate(
            flops=B * C * L,
            transcendentals=0,
            bytes_accessed=B * C * L * itemsize + B * C * 4),
    )(x)

    # Tiny MLP in the wrapper: s is only B*C floats; keeps the heavily padded
    # (C, Cr << 128) matmuls off the kernel's MXU / critical path.
    pooled = sums.reshape(B, C) * (1.0 / L)
    h = jnp.maximum(jnp.dot(pooled, w1) + b1, 0.0)
    z = jnp.dot(h, w2) + b2
    s = jnp.clip(z * (1.0 / 6.0) + 0.5, 0.0, 1.0).astype(jnp.float32)

    # Phase 2: channel-wise rescale over a (B*C, L) view, lane-dense tiles.
    R = B * C
    x2 = x.reshape(R, L)
    s2 = s.reshape(R, 1)
    tl = _pick_tile(L, 128, 2048) if lanes_mode else L
    tr = _pick_tile(R, 8, max(8, block_cap // max(1, tl * itemsize)))

    out2 = pl.pallas_call(
        _rescale_kernel,
        out_shape=jax.ShapeDtypeStruct((R, L), x.dtype),
        grid=(R // tr, L // tl),
        in_specs=[
            pl.BlockSpec((tr, 1), lambda r, l: (r, 0)),
            pl.BlockSpec((tr, tl), lambda r, l: (r, l)),
        ],
        out_specs=pl.BlockSpec((tr, tl), lambda r, l: (r, l)),
        compiler_params=pltpu.CompilerParams(
            dimension_semantics=("parallel", "parallel"),
            vmem_limit_bytes=vmem_limit),
        cost_estimate=pl.CostEstimate(
            flops=R * L,
            transcendentals=0,
            bytes_accessed=2 * R * L * itemsize + R * 4),
    )(s2, x2)

    return out2.reshape(B, C, L)


def se_block_reference(x, w1, b1, w2, b2):
    """Pure-JAX reference mirroring the PyTorch forward."""
    pooled = jnp.mean(x, axis=-1)                       # (B, C)
    h = jnp.maximum(pooled @ w1 + b1, 0.0)              # (B, Cr)
    s = jnp.clip((h @ w2 + b2) / 6.0 + 0.5, 0.0, 1.0)   # (B, C)
    return x * s[:, :, None]


if __name__ == "__main__":
    # in_channel = 8, ratio = 1 -> Cr = 8 ; small deterministic shapes.
    B, C, L = 2, 8, 16
    Cr = C

    key = jax.random.PRNGKey(0)
    kx, kw1, kb1, kw2, kb2, kx2 = jax.random.split(key, 6)

    x = jax.random.normal(kx, (B, C, L), dtype=jnp.float32)

    # PyTorch Linear stores weight as (out, in); transpose to (in, out).
    w1 = (jax.random.normal(kw1, (Cr, C), dtype=jnp.float32) * 0.1).T   # (C, Cr)
    b1 = jax.random.normal(kb1, (Cr,), dtype=jnp.float32) * 0.1
    w2 = (jax.random.normal(kw2, (C, Cr), dtype=jnp.float32) * 0.1).T   # (Cr, C)
    b2 = jax.random.normal(kb2, (C,), dtype=jnp.float32) * 0.1

    # Main run: fused single-pass kernel (slab easily fits VMEM).
    out = jax.block_until_ready(se_block(x, w1, b1, w2, b2))
    ref = se_block_reference(x, w1, b1, w2, b2)
    assert out.shape == (B, C, L)
    assert jnp.allclose(out, ref, atol=1e-5, rtol=1e-5), "fused path mismatch"

    # Also exercise the two-phase fallback (lane-dense L, forced).
    L2 = 256
    x2 = jax.random.normal(kx2, (B, C, L2), dtype=jnp.float32)
    out2 = jax.block_until_ready(se_block(x2, w1, b1, w2, b2, fused=False))
    ref2 = se_block_reference(x2, w1, b1, w2, b2)
    assert out2.shape == (B, C, L2)
    assert jnp.allclose(out2, ref2, atol=1e-5, rtol=1e-5), "two-phase path mismatch"

    print("KERNEL_OK")
</pallas_src>

<mosaic_0001>
module attributes {stable_mosaic.version = 11 : i64} {
  func.func @_fused_se_kernel(%arg0: i32, %arg1: memref<1x8x16xf32, #tpu.memory_space<vmem>>, %arg2: memref<8x8xf32, #tpu.memory_space<vmem>>, %arg3: memref<1x8xf32, #tpu.memory_space<vmem>>, %arg4: memref<8x8xf32, #tpu.memory_space<vmem>>, %arg5: memref<1x8xf32, #tpu.memory_space<vmem>>, %arg6: memref<1x8x16xf32, #tpu.memory_space<vmem>>) attributes {dimension_semantics = [#tpu.dimension_semantics<parallel>], iteration_bounds = array<i64: 2>, scalar_prefetch = 0 : i64, scratch_operands = 0 : i64, tpu.core_type = #tpu.core_type<tc>, window_params = [{transform_indices = @transform_0, window_bounds = array<i64: 1, 8, 16>}, {pipeline_mode = #tpu.pipeline_mode<synchronous>, transform_indices = @transform_1, window_bounds = array<i64: 8, 8>}, {pipeline_mode = #tpu.pipeline_mode<synchronous>, transform_indices = @transform_2, window_bounds = array<i64: 1, 8>}, {pipeline_mode = #tpu.pipeline_mode<synchronous>, transform_indices = @transform_3, window_bounds = array<i64: 8, 8>}, {pipeline_mode = #tpu.pipeline_mode<synchronous>, transform_indices = @transform_4, window_bounds = array<i64: 1, 8>}, {transform_indices = @transform_5, window_bounds = array<i64: 1, 8, 16>}]} {
    %c0 = arith.constant 0 : index
    %c0_0 = arith.constant 0 : index
    %c0_1 = arith.constant 0 : index
    %0 = vector.load %arg1[%c0, %c0_0, %c0_1] : memref<1x8x16xf32, #tpu.memory_space<vmem>>, vector<1x8x16xf32>
    %cst = arith.constant dense<0.000000e+00> : vector<1x8xf32>
    %1 = vector.multi_reduction <add>, %0, %cst [2] : vector<1x8x16xf32> to vector<1x8xf32>
    %cst_2 = arith.constant 6.250000e-02 : f32
    %2 = vector.broadcast %cst_2 : f32 to vector<1x8xf32>
    %3 = arith.mulf %1, %2 : vector<1x8xf32>
    %c0_3 = arith.constant 0 : index
    %c0_4 = arith.constant 0 : index
    %4 = vector.load %arg2[%c0_3, %c0_4] : memref<8x8xf32, #tpu.memory_space<vmem>>, vector<8x8xf32>
    %cst_5 = arith.constant dense<0.000000e+00> : vector<1x8xf32>
    %5 = tpu.matmul %3, %4, %cst_5 {dimension_numbers = #tpu.dot_dimension_numbers<[1], [0], [0], [1], [0, 0, 1, 1], [], []>} : vector<1x8xf32>, vector<8x8xf32>, vector<1x8xf32> -> vector<1x8xf32>
    %c0_6 = arith.constant 0 : index
    %c0_7 = arith.constant 0 : index
    %6 = vector.load %arg3[%c0_6, %c0_7] : memref<1x8xf32, #tpu.memory_space<vmem>>, vector<1x8xf32>
    %7 = arith.addf %5, %6 : vector<1x8xf32>
    %cst_8 = arith.constant 0.000000e+00 : f32
    %8 = vector.broadcast %cst_8 : f32 to vector<1x8xf32>
    %9 = arith.maximumf %7, %8 : vector<1x8xf32>
    %c0_9 = arith.constant 0 : index
    %c0_10 = arith.constant 0 : index
    %10 = vector.load %arg4[%c0_9, %c0_10] : memref<8x8xf32, #tpu.memory_space<vmem>>, vector<8x8xf32>
    %cst_11 = arith.constant dense<0.000000e+00> : vector<1x8xf32>
    %11 = tpu.matmul %9, %10, %cst_11 {dimension_numbers = #tpu.dot_dimension_numbers<[1], [0], [0], [1], [0, 0, 1, 1], [], []>} : vector<1x8xf32>, vector<8x8xf32>, vector<1x8xf32> -> vector<1x8xf32>
    %c0_12 = arith.constant 0 : index
    %c0_13 = arith.constant 0 : index
    %12 = vector.load %arg5[%c0_12, %c0_13] : memref<1x8xf32, #tpu.memory_space<vmem>>, vector<1x8xf32>
    %13 = arith.addf %11, %12 : vector<1x8xf32>
    %cst_14 = arith.constant 0.166666672 : f32
    %14 = vector.broadcast %cst_14 : f32 to vector<1x8xf32>
    %15 = arith.mulf %13, %14 : vector<1x8xf32>
    %cst_15 = arith.constant 5.000000e-01 : f32
    %16 = vector.broadcast %cst_15 : f32 to vector<1x8xf32>
    %17 = arith.addf %15, %16 : vector<1x8xf32>
    %cst_16 = arith.constant 0.000000e+00 : f32
    %cst_17 = arith.constant 1.000000e+00 : f32
    %18 = vector.broadcast %cst_16 : f32 to vector<1x8xf32>
    %19 = arith.maximumf %18, %17 : vector<1x8xf32>
    %20 = vector.broadcast %cst_17 : f32 to vector<1x8xf32>
    %21 = arith.minimumf %20, %19 : vector<1x8xf32>
    %22 = vector.shape_cast %21 : vector<1x8xf32> to vector<1x8x1xf32>
    %23 = vector.broadcast %22 : vector<1x8x1xf32> to vector<1x8x16xf32>
    %24 = arith.mulf %0, %23 : vector<1x8x16xf32>
    %c0_18 = arith.constant 0 : index
    %c0_19 = arith.constant 0 : index
    %c0_20 = arith.constant 0 : index
    %25 = vector.load %arg6[%c0_18, %c0_19, %c0_20] : memref<1x8x16xf32, #tpu.memory_space<vmem>>, vector<1x8x16xf32>
    tpu.vector_store %arg6[%c0_18, %c0_19, %c0_20], %24 {strides = array<i32>} : memref<1x8x16xf32, #tpu.memory_space<vmem>>, vector<1x8x16xf32>,
    return
  }
  func.func @transform_0(%arg0: i32) -> (i32, i32, i32) {
    %c0_i32 = arith.constant 0 : i32
    %c0_i32_0 = arith.constant 0 : i32
    %c0_i32_1 = arith.constant 0 : i32
    return %arg0, %c0_i32, %c0_i32_0 : i32, i32, i32
  }
  func.func @transform_1(%arg0: i32) -> (i32, i32) {
    %c0_i32 = arith.constant 0 : i32
    %c0_i32_0 = arith.constant 0 : i32
    %c0_i32_1 = arith.constant 0 : i32
    return %c0_i32, %c0_i32_0 : i32, i32
  }
  func.func @transform_2(%arg0: i32) -> (i32, i32) {
    %c0_i32 = arith.constant 0 : i32
    %c0_i32_0 = arith.constant 0 : i32
    %c0_i32_1 = arith.constant 0 : i32
    return %c0_i32, %c0_i32_0 : i32, i32
  }
  func.func @transform_3(%arg0: i32) -> (i32, i32) {
    %c0_i32 = arith.constant 0 : i32
    %c0_i32_0 = arith.constant 0 : i32
    %c0_i32_1 = arith.constant 0 : i32
    return %c0_i32, %c0_i32_0 : i32, i32
  }
  func.func @transform_4(%arg0: i32) -> (i32, i32) {
    %c0_i32 = arith.constant 0 : i32
    %c0_i32_0 = arith.constant 0 : i32
    %c0_i32_1 = arith.constant 0 : i32
    return %c0_i32, %c0_i32_0 : i32, i32
  }
  func.func @transform_5(%arg0: i32) -> (i32, i32, i32) {
    %c0_i32 = arith.constant 0 : i32
    %c0_i32_0 = arith.constant 0 : i32
    %c0_i32_1 = arith.constant 0 : i32
    return %arg0, %c0_i32, %c0_i32_0 : i32, i32, i32
  }
}

</mosaic_0001>

<llo_original>
// kernel: tpu_custom_call.1
$region0: #{tpu_custom_call.1}
  #allocation0 [shape = 'u32[]', space=smem, size = 0x4, offset = 0x4, fixed_abs, tag = 'smem constant byte address 0x4 - core index']
  #allocation1 [shape = 'u32[144,128]{1,0:T(1,128)}', space=vmem, size = 0x12000, scoped, tag = 'internal scratch']
  %s0 = inlined_call_operand.hbm [shape: f32[2,8,16], index: 0, kind: input, shape index: {}]
  %s1 = inlined_call_operand.hbm [shape: f32[8,8], index: 1, kind: input, shape index: {}]
  %s2 = inlined_call_operand.vmem [shape: f32[1,8], index: 2, kind: input, shape index: {}]
  %s3 = inlined_call_operand.vmem [shape: f32[8,8], index: 3, kind: input, shape index: {}]
  %s4 = inlined_call_operand.vmem [shape: f32[1,8], index: 4, kind: input, shape index: {}]
  %s5 = inlined_call_operand.hbm [shape: f32[2,8,16], index: 5, kind: output, shape index: {}]
  %s6 = sld [smem:[#allocation0]]
  $region61: #{tpu_custom_call.1} parent=0
    _
  %s8 = ssub.s32 1, %s6
  %s9 = scalar_select 0, %s8, %s6
  $region1: #{tpu_custom_call.1} parent=0
    #allocation2 [shape = 'u8[8192]{0}', space=vmem, size = 0x2000, scoped, tag = 'input window, operand 0']
    #allocation3 [shape = 's32[2]{0}', space=sflag, size = 0x8, scoped, tag = 'scoped memory for tpu_custom_call.1']
    #allocation4 [shape = 's32[2]{0}', space=sflag, size = 0x8, scoped, tag = 'scoped memory for tpu_custom_call.1']
    #allocation5 [shape = 'u8[4096]{0}', space=vmem, size = 0x1000, scoped, tag = 'input window, operand 1, single buffered']
    #allocation6 [shape = 's32[1]{0}', space=sflag, size = 0x4, scoped, tag = 'scoped memory for tpu_custom_call.1']
    #allocation7 [shape = 'u8[8192]{0}', space=vmem, size = 0x2000, scoped, tag = 'output window, operand 0']
    %10 = vsyncpa [#allocation3], 0
    %s11 = scalar_lea.sflag [#allocation3], 1
    %12 = vsyncpa %s11, 0
    %13 = vsyncpa [#allocation6], 0
    %14 = vsyncpa [#allocation4], 0
    %s15 = scalar_lea.sflag [#allocation4], 1
    %16 = vsyncpa %s15, 0
    loop: start=0, step=1, limit=4
    $region2: #{tpu_custom_call.1} parent=1 // loop_pre_header
      _
    $region3: #{tpu_custom_call.1} parent=1 // loop_header
      %s18 = sphi 0, %s22
      %p19 = scmp.ge.s32.totalorder %s18, 4
      %s28 = sphi 0, %s30
      %s31 = sphi 0, %s28
      %s32 = sphi 0, %s31
      %s48 = sphi 0, %s32
      %s52 = sphi 0, %s52
      %s54 = sphi 0, %s52
      %s55 = sphi 0, %s54
      %s69 = sphi 0, %s55
      %s73 = sphi 0, %s73
      %s75 = sphi 0, %s73
      %s76 = sphi 0, %s75
      %s90 = sphi 0, %s76
      %s94 = sphi 0, %s94
      %s96 = sphi 0, %s94
      %s97 = sphi 0, %s96
      %s111 = sphi 0, %s97
      %s115 = sphi 0, %s115
      %s117 = sphi 0, %s115
      %s118 = sphi 0, %s117
      %s132 = sphi 0, %s118
      %s138 = sphi 0, %s140
      %s141 = sphi 0, %s138
      %s142 = sphi 0, %s141
      %s158 = sphi 0, %s142
    $region4: #{tpu_custom_call.1} parent=1 // loop_header_branch
      %21 = sbr.rel (%p19) target = $region8
    $region5: #{tpu_custom_call.1} parent=1 // loop_body
      %s23 = ssub.s32 %s18, 1
      %s24 = ssub.s32 %s18, 2
      %s25 = sadd.s32 %s18, 1
      %s26 = ssub.s32 %s18, %s25
      %p27 = scmp.eq.s32.totalorder %s26, 0
      %s29 = sadd.s32 %s28, 1
      %s30 = scalar_select %p27, %s28, %s29
      %p33 = pneg %p27
      %p34 = scmp.eq.s32.totalorder %s18, 1
      %p35 = por %p33, %p34
      %p36 = scmp.ne.s32.totalorder %s28, %s31
      %p37 = scmp.eq.s32.totalorder %s18, 0
      %p38 = por %p36, %p37
      %p39 = scmp.ne.s32.totalorder %s28, %s31
      %p40 = scmp.eq.s32.totalorder %s23, 1
      %p41 = por %p39, %p40
      %p42 = scmp.ne.s32.totalorder %s31, %s32
      %p43 = scmp.eq.s32.totalorder %s23, 0
      %p44 = por %p42, %p43
      %p45 = scmp.ne.s32.totalorder %s31, %s32
      %p46 = scmp.eq.s32.totalorder %s24, 1
      %p47 = por %p45, %p46
      %p49 = scmp.ne.s32.totalorder %s32, %s48
      %p50 = scmp.eq.s32.totalorder %s24, 0
      %p51 = por %p49, %p50
      %s53 = sadd.s32 %s52, 1
      %p56 = scmp.eq.s32.totalorder %s18, 1
      %p57 = scmp.ne.s32.totalorder %s52, %s54
      %p58 = scmp.eq.s32.totalorder %s18, 0
      %p59 = por %p57, %p58
      %p60 = scmp.ne.s32.totalorder %s52, %s54
      %p61 = scmp.eq.s32.totalorder %s23, 1
      %p62 = por %p60, %p61
      %p63 = scmp.ne.s32.totalorder %s54, %s55
      %p64 = scmp.eq.s32.totalorder %s23, 0
      %p65 = por %p63, %p64
      %p66 = scmp.ne.s32.totalorder %s54, %s55
      %p67 = scmp.eq.s32.totalorder %s24, 1
      %p68 = por %p66, %p67
      %p70 = scmp.ne.s32.totalorder %s55, %s69
      %p71 = scmp.eq.s32.totalorder %s24, 0
      %p72 = por %p70, %p71
      %s74 = sadd.s32 %s73, 1
      %p77 = scmp.eq.s32.totalorder %s18, 1
      %p78 = scmp.ne.s32.totalorder %s73, %s75
      %p79 = scmp.eq.s32.totalorder %s18, 0
      %p80 = por %p78, %p79
      %p81 = scmp.ne.s32.totalorder %s73, %s75
      %p82 = scmp.eq.s32.totalorder %s23, 1
      %p83 = por %p81, %p82
      %p84 = scmp.ne.s32.totalorder %s75, %s76
      %p85 = scmp.eq.s32.totalorder %s23, 0
      %p86 = por %p84, %p85
      %p87 = scmp.ne.s32.totalorder %s75, %s76
      %p88 = scmp.eq.s32.totalorder %s24, 1
      %p89 = por %p87, %p88
      %p91 = scmp.ne.s32.totalorder %s76, %s90
      %p92 = scmp.eq.s32.totalorder %s24, 0
      %p93 = por %p91, %p92
      %s95 = sadd.s32 %s94, 1
      %p98 = scmp.eq.s32.totalorder %s18, 1
      %p99 = scmp.ne.s32.totalorder %s94, %s96
      %p100 = scmp.eq.s32.totalorder %s18, 0
      %p101 = por %p99, %p100
      %p102 = scmp.ne.s32.totalorder %s94, %s96
      %p103 = scmp.eq.s32.totalorder %s23, 1
      %p104 = por %p102, %p103
      %p105 = scmp.ne.s32.totalorder %s96, %s97
      %p106 = scmp.eq.s32.totalorder %s23, 0
      %p107 = por %p105, %p106
      %p108 = scmp.ne.s32.totalorder %s96, %s97
      %p109 = scmp.eq.s32.totalorder %s24, 1
      %p110 = por %p108, %p109
      %p112 = scmp.ne.s32.totalorder %s97, %s111
      %p113 = scmp.eq.s32.totalorder %s24, 0
      %p114 = por %p112, %p113
      %s116 = sadd.s32 %s115, 1
      %p119 = scmp.eq.s32.totalorder %s18, 1
      %p120 = scmp.ne.s32.totalorder %s115, %s117
      %p121 = scmp.eq.s32.totalorder %s18, 0
      %p122 = por %p120, %p121
      %p123 = scmp.ne.s32.totalorder %s115, %s117
      %p124 = scmp.eq.s32.totalorder %s23, 1
      %p125 = por %p123, %p124
      %p126 = scmp.ne.s32.totalorder %s117, %s118
      %p127 = scmp.eq.s32.totalorder %s23, 0
      %p128 = por %p126, %p127
      %p129 = scmp.ne.s32.totalorder %s117, %s118
      %p130 = scmp.eq.s32.totalorder %s24, 1
      %p131 = por %p129, %p130
      %p133 = scmp.ne.s32.totalorder %s118, %s132
      %p134 = scmp.eq.s32.totalorder %s24, 0
      %p135 = por %p133, %p134
      %s136 = ssub.s32 %s18, %s25
      %p137 = scmp.eq.s32.totalorder %s136, 0
      %s139 = sadd.s32 %s138, 1
      %s140 = scalar_select %p137, %s138, %s139
      %p143 = pneg %p137
      %p144 = scmp.eq.s32.totalorder %s18, 1
      %p145 = por %p143, %p144
      %p146 = scmp.ne.s32.totalorder %s138, %s141
      %p147 = scmp.eq.s32.totalorder %s18, 0
      %p148 = por %p146, %p147
      %p149 = scmp.ne.s32.totalorder %s138, %s141
      %p150 = scmp.eq.s32.totalorder %s23, 1
      %p151 = por %p149, %p150
      %p152 = scmp.ne.s32.totalorder %s141, %s142
      %p153 = scmp.eq.s32.totalorder %s23, 0
      %p154 = por %p152, %p153
      %p155 = scmp.ne.s32.totalorder %s141, %s142
      %p156 = scmp.eq.s32.totalorder %s24, 1
      %p157 = por %p155, %p156
      %p159 = scmp.ne.s32.totalorder %s142, %s158
      %p160 = scmp.eq.s32.totalorder %s24, 0
      %p161 = por %p159, %p160
      %p162 = scmp.le.s32.totalorder 1, %s18
      %p163 = scmp.lt.s32.totalorder %s18, 3
      %p164 = pnand %p162, %p163
      %p165 = pneg %p164
      // Predicated region
      $region9: #{tpu_custom_call.1} parent=5 // pred_check
        _
      $region10: #{tpu_custom_call.1} parent=5 // pred_check_branch
        %167 = sbr.rel (%p164) target = $region12
      $region11: #{tpu_custom_call.1} parent=5 // pred_region
        %s168 = ssub.s32 %s18, 1
        // Predicated region
        $region13: #{tpu_custom_call.1} parent=11 // pred_check
          %p169 = pneg %p65
        $region14: #{tpu_custom_call.1} parent=11 // pred_check_branch
          %171 = sbr.rel (%p169) target = $region16
        $region15: #{tpu_custom_call.1} parent=11 // pred_region
          %s173 = ssub.s32 128, 128
          %174 = vsyncadd [#allocation6], %s173
          %s176 = sshll.u32 [#allocation5], 4
          %s177 = int_to_ptr.vmem [resolvable:$true] %s176
          %179 = dma.hbm_to_vmem [thread:$0]  %s1, 128, %s177, [#allocation6]
        $region16: #{tpu_custom_call.1} parent=11 // pred_fallthru
          _
        // Predicated region
        $region17: #{tpu_custom_call.1} parent=11 // pred_check
          %p180 = pneg %p86
        $region18: #{tpu_custom_call.1} parent=11 // pred_check_branch
          %182 = sbr.rel (%p180) target = $region20
        $region19: #{tpu_custom_call.1} parent=11 // pred_region
          _
        $region20: #{tpu_custom_call.1} parent=11 // pred_fallthru
          _
        // Predicated region
        $region21: #{tpu_custom_call.1} parent=11 // pred_check
          %p183 = pneg %p107
        $region22: #{tpu_custom_call.1} parent=11 // pred_check_branch
          %185 = sbr.rel (%p183) target = $region24
        $region23: #{tpu_custom_call.1} parent=11 // pred_region
          _
        $region24: #{tpu_custom_call.1} parent=11 // pred_fallthru
          _
        // Predicated region
        $region25: #{tpu_custom_call.1} parent=11 // pred_check
          %p186 = pneg %p128
        $region26: #{tpu_custom_call.1} parent=11 // pred_check_branch
          %188 = sbr.rel (%p186) target = $region28
        $region27: #{tpu_custom_call.1} parent=11 // pred_region
          _
        $region28: #{tpu_custom_call.1} parent=11 // pred_fallthru
          _
      $region12: #{tpu_custom_call.1} parent=5 // pred_fallthru
        _
      %p189 = scmp.lt.s32.totalorder %s18, 2
      // Predicated region
      $region29: #{tpu_custom_call.1} parent=5 // pred_check
        %p190 = pneg %p189
      $region30: #{tpu_custom_call.1} parent=5 // pred_check_branch
        %192 = sbr.rel (%p190) target = $region32
      $region31: #{tpu_custom_call.1} parent=5 // pred_region
        // Predicated region
        $region33: #{tpu_custom_call.1} parent=31 // pred_check
          %p193 = pneg %p38
        $region34: #{tpu_custom_call.1} parent=31 // pred_check_branch
          %195 = sbr.rel (%p193) target = $region36
        $region35: #{tpu_custom_call.1} parent=31 // pred_region
          %s196 = sand.u32 %s28, 1
          %s197 = scalar_lea.sflag [#allocation3], %s196
          %s198 = sand.u32 %s28, 1
          %s199 = smul.addr %s198, 8
          %s200 = scalar_lea.vmem [#allocation2], %s199
          %s202 = ssub.s32 128, 128
          %203 = vsyncadd %s197, %s202
          %s204 = smul.addr %s18, 128
          %s205 = scalar_lea.hbm %s0, %s204
          %s207 = sshll.u32 %s200, 4
          %s208 = int_to_ptr.vmem [resolvable:$true] %s207
          %210 = dma.hbm_to_vmem [thread:$0]  %s205, 128, %s208, %s197
        $region36: #{tpu_custom_call.1} parent=31 // pred_fallthru
          _
      $region32: #{tpu_custom_call.1} parent=5 // pred_fallthru
        _
      %p211 = scmp.le.s32.totalorder 1, %s18
      %p212 = scmp.lt.s32.totalorder %s18, 3
      %p213 = pnand %p211, %p212
      %p214 = pneg %p213
      // Predicated region
      $region37: #{tpu_custom_call.1} parent=5 // pred_check
        _
      $region38: #{tpu_custom_call.1} parent=5 // pred_check_branch
        %216 = sbr.rel (%p213) target = $region40
      $region39: #{tpu_custom_call.1} parent=5 // pred_region
        %s217 = ssub.s32 %s18, 1
        %s218 = sand.u32 %s31, 1
        %s219 = scalar_lea.sflag [#allocation3], %s218
        %s220 = sand.u32 %s31, 1
        %s221 = smul.addr %s220, 8
        %s222 = scalar_lea.vmem [#allocation2], %s221
        // Predicated region
        $region41: #{tpu_custom_call.1} parent=39 // pred_check
          %p223 = pneg %p44
        $region42: #{tpu_custom_call.1} parent=39 // pred_check_branch
          %225 = sbr.rel (%p223) target = $region44
        $region43: #{tpu_custom_call.1} parent=39 // pred_region
          %226 = dma.done %s219, 128
        $region44: #{tpu_custom_call.1} parent=39 // pred_fallthru
          _
        // Predicated region
        $region45: #{tpu_custom_call.1} parent=39 // pred_check
          %p227 = pneg %p65
        $region46: #{tpu_custom_call.1} parent=39 // pred_check_branch
          %229 = sbr.rel (%p227) target = $region48
        $region47: #{tpu_custom_call.1} parent=39 // pred_region
          %230 = dma.done [#allocation6], 128
        $region48: #{tpu_custom_call.1} parent=39 // pred_fallthru
          _
        %s231 = sand.u32 %s31, 1
        %s232 = scalar_lea.sflag [#allocation3], %s231
        %s233 = sand.u32 %s31, 1
        %s234 = smul.addr %s233, 8
        %s235 = scalar_lea.vmem [#allocation2], %s234
        %p236 = pneg %p44
        %p237 = pneg %p41
        %p238 = pneg %p65
        %p239 = pneg %p62
        %p240 = pneg %p86
        %p241 = pneg %p83
        %p242 = pneg %p107
        %p243 = pneg %p104
        %p244 = pneg %p128
        %p245 = pneg %p125
        %p246 = pneg %p154
        %p247 = pneg %p151
        %s248 = sand.u32 %s141, 1
        %s249 = scalar_lea.sflag [#allocation4], %s248
        %s250 = sand.u32 %s141, 1
        %s251 = smul.addr %s250, 8
        %s252 = scalar_lea.vmem [#allocation7], %s251
        %v253 = vld [vmem:[%s222] sm:$0xff]
        %vm254 = vcmask 130048
        %v255 = vsel %vm254, %v253, 0.0
        %256 = vadd.xlane.f32.xlu0 %v255
        %v257 = vpop.xlane.xlu0 %256
        %v258 = vmul.f32 %v257, 0.0625
        %v259 = vld [vmem:[#allocation5] sm:$0xff]
        %v260 = vld [vmem:[%s2] sm:$0x1]
        %v262 = vlaneseq
        %v263 = vand.u32 %v262, 127
        %v264 = vlaneseq
        %v265 = vshrl.u32 %v264, 7
        %v266 = vsub.s32 %v263, %v265
        %v267 = vrot.slane %v258, %v266
        %vm268 = vcmask 64512
        %v269 = vsel %vm268, %v267, 0
        %271 = vmatprep.subr.mxu0 0.0
        %272 = vmatpush1.msra.mxu0 %v259
        %273 = vmatprep.subr.mxu0 0.0
        %274 = vmatpush1.msra.mxu0 0.0
        %275 = vmatprep.subr.mxu0 0.0
        %276 = vmatpush1.msra.mxu0 0.0
        %277 = vmatprep.subr.mxu0 0.0
        %278 = vmatpush1.msra.mxu0 0.0
        %279 = vmatprep.subr.mxu0 0.0
        %280 = vmatpush1.msra.mxu0 0.0
        %281 = vmatprep.subr.mxu0 0.0
        %282 = vmatpush1.msra.mxu0 0.0
        %283 = vmatprep.subr.mxu0 0.0
        %284 = vmatpush1.msra.mxu0 0.0
        %285 = vmatprep.subr.mxu0 0.0
        %286 = vmatpush1.msra.mxu0 0.0
        %287 = vmatprep.subr.mxu0 0.0
        %288 = vmatpush1.msra.mxu0 0.0
        %289 = vmatprep.subr.mxu0 0.0
        %290 = vmatpush1.msra.mxu0 0.0
        %291 = vmatprep.subr.mxu0 0.0
        %292 = vmatpush1.msra.mxu0 0.0
        %293 = vmatprep.subr.mxu0 0.0
        %294 = vmatpush1.msra.mxu0 0.0
        %295 = vmatprep.subr.mxu0 0.0
        %296 = vmatpush1.msra.mxu0 0.0
        %297 = vmatprep.subr.mxu0 0.0
        %298 = vmatpush1.msra.mxu0 0.0
        %299 = vmatprep.subr.mxu0 0.0
        %300 = vmatpush1.msra.mxu0 0.0
        %301 = vmatprep.subr.mxu0 0.0
        %302 = vmatpush1.msra.mxu0 0.0
        %303 = vmatprep.subr.mxu0 0.0
        %304 = vmatpush1.msra.mxu0 0.0
        %305 = vmatprep.subr.mxu0 0.0
        %306 = vmatpush1.msra.mxu0 0.0
        %307 = vmatprep.subr.mxu0 0.0
        %308 = vmatpush1.msra.mxu0 0.0
        %309 = vmatprep.subr.mxu0 0.0
        %310 = vmatpush1.msra.mxu0 0.0
        %311 = vmatprep.subr.mxu0 0.0
        %312 = vmatpush1.msra.mxu0 0.0
        %313 = vmatprep.subr.mxu0 0.0
        %314 = vmatpush1.msra.mxu0 0.0
        %315 = vmatprep.subr.mxu0 0.0
        %316 = vmatpush1.msra.mxu0 0.0
        %317 = vmatprep.subr.mxu0 0.0
        %318 = vmatpush1.msra.mxu0 0.0
        %319 = vmatprep.subr.mxu0 0.0
        %320 = vmatpush1.msra.mxu0 0.0
        %321 = vmatprep.subr.mxu0 0.0
        %322 = vmatpush1.msra.mxu0 0.0
        %323 = vmatprep.subr.mxu0 0.0
        %324 = vmatpush1.msra.mxu0 0.0
        %325 = vmatprep.subr.mxu0 0.0
        %326 = vmatpush1.msra.mxu0 0.0
        %327 = vmatprep.subr.mxu0 0.0
        %328 = vmatpush1.msra.mxu0 0.0
        %329 = vmatprep.subr.mxu0 0.0
        %330 = vmatpush1.msra.mxu0 0.0
        %331 = vmatprep.subr.mxu0 0.0
        %332 = vmatpush1.msra.mxu0 0.0
        %333 = vmatprep.subr.mxu0 0.0
        %334 = vmatpush1.msra.mxu0 0.0
        %335 = vmatprep.mubr.f32.mxu0 0.0
        %336 = vmatmul.mubr.f32.gmra.mrb[0].mxu0 %v269
        %v337 = vpop.f32.mrb[0].mxu0
        %v338 = vadd.f32 %v260, %v337
        %v339 = vpop.f32.mrb[0].mxu0
        %340 = vdwg.mxu0
        %v341 = vmax.f32 %v338, 0.0
        %v342 = vld [vmem:[%s3] sm:$0xff]
        %v343 = vld [vmem:[%s4] sm:$0x1]
        %v345 = vsel %vm268, %v341, 0
        %347 = vmatprep.subr.mxu0 0.0
        %348 = vmatpush1.msra.mxu0 %v342
        %349 = vmatprep.subr.mxu0 0.0
        %350 = vmatpush1.msra.mxu0 0.0
        %351 = vmatprep.subr.mxu0 0.0
        %352 = vmatpush1.msra.mxu0 0.0
        %353 = vmatprep.subr.mxu0 0.0
        %354 = vmatpush1.msra.mxu0 0.0
        %355 = vmatprep.subr.mxu0 0.0
        %356 = vmatpush1.msra.mxu0 0.0
        %357 = vmatprep.subr.mxu0 0.0
        %358 = vmatpush1.msra.mxu0 0.0
        %359 = vmatprep.subr.mxu0 0.0
        %360 = vmatpush1.msra.mxu0 0.0
        %361 = vmatprep.subr.mxu0 0.0
        %362 = vmatpush1.msra.mxu0 0.0
        %363 = vmatprep.subr.mxu0 0.0
        %364 = vmatpush1.msra.mxu0 0.0
        %365 = vmatprep.subr.mxu0 0.0
        %366 = vmatpush1.msra.mxu0 0.0
        %367 = vmatprep.subr.mxu0 0.0
        %368 = vmatpush1.msra.mxu0 0.0
        %369 = vmatprep.subr.mxu0 0.0
        %370 = vmatpush1.msra.mxu0 0.0
        %371 = vmatprep.subr.mxu0 0.0
        %372 = vmatpush1.msra.mxu0 0.0
        %373 = vmatprep.subr.mxu0 0.0
        %374 = vmatpush1.msra.mxu0 0.0
        %375 = vmatprep.subr.mxu0 0.0
        %376 = vmatpush1.msra.mxu0 0.0
        %377 = vmatprep.subr.mxu0 0.0
        %378 = vmatpush1.msra.mxu0 0.0
        %379 = vmatprep.subr.mxu0 0.0
        %380 = vmatpush1.msra.mxu0 0.0
        %381 = vmatprep.subr.mxu0 0.0
        %382 = vmatpush1.msra.mxu0 0.0
        %383 = vmatprep.subr.mxu0 0.0
        %384 = vmatpush1.msra.mxu0 0.0
        %385 = vmatprep.subr.mxu0 0.0
        %386 = vmatpush1.msra.mxu0 0.0
        %387 = vmatprep.subr.mxu0 0.0
        %388 = vmatpush1.msra.mxu0 0.0
        %389 = vmatprep.subr.mxu0 0.0
        %390 = vmatpush1.msra.mxu0 0.0
        %391 = vmatprep.subr.mxu0 0.0
        %392 = vmatpush1.msra.mxu0 0.0
        %393 = vmatprep.subr.mxu0 0.0
        %394 = vmatpush1.msra.mxu0 0.0
        %395 = vmatprep.subr.mxu0 0.0
        %396 = vmatpush1.msra.mxu0 0.0
        %397 = vmatprep.subr.mxu0 0.0
        %398 = vmatpush1.msra.mxu0 0.0
        %399 = vmatprep.subr.mxu0 0.0
        %400 = vmatpush1.msra.mxu0 0.0
        %401 = vmatprep.subr.mxu0 0.0
        %402 = vmatpush1.msra.mxu0 0.0
        %403 = vmatprep.subr.mxu0 0.0
        %404 = vmatpush1.msra.mxu0 0.0
        %405 = vmatprep.subr.mxu0 0.0
        %406 = vmatpush1.msra.mxu0 0.0
        %407 = vmatprep.subr.mxu0 0.0
        %408 = vmatpush1.msra.mxu0 0.0
        %409 = vmatprep.subr.mxu0 0.0
        %410 = vmatpush1.msra.mxu0 0.0
        %411 = vmatprep.mubr.f32.mxu0 0.0
        %412 = vmatmul.mubr.f32.gmra.mrb[0].mxu0 %v345
        %v413 = vpop.f32.mrb[0].mxu0
        %v414 = vadd.f32 %v343, %v413
        %v415 = vpop.f32.mrb[0].mxu0
        %416 = vdwg.mxu0
        %v417 = vmul.f32 %v414, 0.16666667
        %v418 = vadd.f32 %v417, 0.5
        %v419 = vmax.f32 %v418, 0.0
        %v420 = vmin.f32 %v419, 1.0
        %v421 = vlaneseq
        %v422 = vshrl.u32 %v421, 7
        %v423 = vsub.s32 0, %v422
        %v424 = vrot.slane %v420, %v423
        %426 = vbcast.lane.b32.xlu0 %v424, 256
        %v427 = vpop.permute.xlu0 %426
        %v428 = vmul.f32 %v253, %v427
        %429 = vst.msk [vmem:[%s252] sm:$0xff] %vm254, %v428
        %s430 = sand.u32 %s141, 1
        %s431 = scalar_lea.sflag [#allocation4], %s430
        %s432 = sand.u32 %s141, 1
        %s433 = smul.addr %s432, 8
        %s434 = scalar_lea.vmem [#allocation7], %s433
        // Predicated region
        $region49: #{tpu_custom_call.1} parent=39 // pred_check
          %p435 = pneg %p151
        $region50: #{tpu_custom_call.1} parent=39 // pred_check_branch
          %437 = sbr.rel (%p435) target = $region52
        $region51: #{tpu_custom_call.1} parent=39 // pred_region
          %s439 = ssub.s32 128, 128
          %440 = vsyncadd %s431, %s439
          %s441 = smul.addr %s23, 128
          %s442 = scalar_lea.hbm %s5, %s441
          %s444 = sshll.u32 %s434, 4
          %s445 = int_to_ptr.vmem [resolvable:$true] %s444
          %447 = dma.vmem_to_hbm [thread:$0]  %s445, 128, %s442, %s431
        $region52: #{tpu_custom_call.1} parent=39 // pred_fallthru
          _
      $region40: #{tpu_custom_call.1} parent=5 // pred_fallthru
        _
      %p448 = scmp.le.s32.totalorder 2, %s18
      // Predicated region
      $region53: #{tpu_custom_call.1} parent=5 // pred_check
        %p449 = pneg %p448
      $region54: #{tpu_custom_call.1} parent=5 // pred_check_branch
        %451 = sbr.rel (%p449) target = $region56
      $region55: #{tpu_custom_call.1} parent=5 // pred_region
        %s452 = ssub.s32 %s18, 2
        // Predicated region
        $region57: #{tpu_custom_call.1} parent=55 // pred_check
          %p453 = pneg %p157
        $region58: #{tpu_custom_call.1} parent=55 // pred_check_branch
          %455 = sbr.rel (%p453) target = $region60
        $region59: #{tpu_custom_call.1} parent=55 // pred_region
          %s456 = sand.u32 %s142, 1
          %s457 = scalar_lea.sflag [#allocation4], %s456
          %s458 = sand.u32 %s142, 1
          %s459 = smul.addr %s458, 8
          %s460 = scalar_lea.vmem [#allocation7], %s459
          %461 = dma.done %s457, 128
        $region60: #{tpu_custom_call.1} parent=55 // pred_fallthru
          _
      $region56: #{tpu_custom_call.1} parent=5 // pred_fallthru
        _
    $region6: #{tpu_custom_call.1} parent=1 // loop_footer
      %s22 = sadd.s32 1, %s18
    $region7: #{tpu_custom_call.1} parent=1 // loop_footer_branch
      %17 = sbr.rel target = $region3
    $region8: #{tpu_custom_call.1} parent=1 // loop_exit
      _
    %462 = vsyncpa [#allocation3], 1
    %s463 = scalar_lea.sflag [#allocation3], 1
    %464 = vsyncpa %s463, 1
    %465 = vsyncpa [#allocation6], 1
    %466 = vsyncpa [#allocation4], 1
    %s467 = scalar_lea.sflag [#allocation4], 1
    %468 = vsyncpa %s467, 1

</llo_original>
